<compile_context>
chip_gen: v7x
topology: tpu7x:2x2x1
jax: 0.10.0
libtpu: 0.0.40
codegen_flags: <defaults>
</compile_context>

<pallas_src>
import jax
import jax.numpy as jnp
from jax.experimental import pallas as pl
from jax.experimental.pallas import tpu as pltpu


def _round_up(x, m):
    return ((x + m - 1) // m) * m


def ensemble_soft_kernel(x_ref, w_ref, b_ref, p_ref, g_ref, out_ref):
    """One fused step per batch tile.

    x_ref   : [tb, D]          f32 activations (cast to bf16 in-kernel)
    w_ref   : [D, c_tot]       bf16 densely packed per-model weights (padded cols zero)
    b_ref   : [1, c_tot]       f32 packed biases (-1e30 on padded columns)
    p_ref   : [c_tot, c_tot]   f32 block-diagonal ones: P[j,k]=1 iff same model
    g_ref   : [c_tot, c_out]   f32 column->class gather matrix with 1/M folded in
    out_ref : [tb, c_out]      f32 averaged log-probabilities (padded classes sliced off)
    """
    # In-kernel VPU cast (free under the MXU); single fused MXU call for all M models.
    x = x_ref[...].astype(jnp.bfloat16)
    logits = jnp.dot(x, w_ref[...], preferred_element_type=jnp.float32) + b_ref[...]

    # Row-global max: each per-model softmax is shift invariant, so subtracting one
    # per-row constant is exact for every packed segment; padded columns carry a
    # -1e30 bias so their exp underflows to exactly 0.
    mx = jnp.max(logits, axis=-1, keepdims=True)
    e = jnp.exp(logits - mx)                                        # [tb, c_tot]

    # Per-column (= per-model) softmax denominators via one block-diagonal ones matmul
    # on the MXU.  The tiny clamp guards the pathological case of a model whose whole
    # logit range sits >~88 below the global max (denominator underflow -> 0).
    denom = jnp.dot(e, p_ref[...], preferred_element_type=jnp.float32)
    denom = jnp.maximum(denom, jnp.float32(1e-30))
    probs = e / denom                                               # packed per-model softmax

    # Sum over models per class; the 1/M mean is folded into g host-side.
    avg = jnp.dot(probs, g_ref[...], preferred_element_type=jnp.float32)
    avg = jnp.maximum(avg, jnp.float32(1e-40))                      # torch.clamp(min=1e-40)
    out_ref[...] = jnp.log(avg).astype(out_ref.dtype)


def prepare_ensemble_soft(weights, biases):
    """One-time host-side parameter prep.  Call once; reuse across forward calls.

    weights: [M, D, C] f32, biases: [M, C] f32.
    """
    M, D, C = weights.shape
    mc = M * C
    c_tot = _round_up(mc, 128)          # densely packed columns, total padded to lanes
    c_out = _round_up(C, 128)           # lane-dense output slab

    # Fused weights: column m*C + c  <-  weights[m, :, c]; padded columns zero.
    w_dense = jnp.transpose(weights, (1, 0, 2)).reshape(D, mc).astype(jnp.bfloat16)
    w_fused = jnp.zeros((D, c_tot), jnp.bfloat16).at[:, :mc].set(w_dense)

    # Fused biases in f32; -1e30 on padded columns so exp underflows to exactly 0.
    b_fused = jnp.full((1, c_tot), -1e30, dtype=jnp.float32).at[0, :mc].set(
        biases.reshape(mc).astype(jnp.float32))

    col = jnp.arange(c_tot)
    model_of_col = jnp.where(col < mc, col // C, -1)
    class_of_col = jnp.where(col < mc, col % C, -1)

    # Block-diagonal ones matrix: P[j, k] = 1 iff columns j and k belong to the same model.
    pmat = ((model_of_col[:, None] == model_of_col[None, :])
            & (model_of_col[:, None] >= 0)).astype(jnp.float32)     # [c_tot, c_tot]

    # Gather matrix with the 1/M mean folded in: G[j, c] = 1/M iff column j is class c.
    gmat = (class_of_col[:, None] == jnp.arange(c_out)[None, :]).astype(jnp.float32) / M

    return {"w": w_fused, "b": b_fused, "p": pmat, "g": gmat,
            "num_classes": C, "num_models": M}


def ensemble_soft(x_flat, prepared, *, block_b=512):
    """x_flat: [B, D] f32; prepared: output of prepare_ensemble_soft -> [B, C] f32."""
    w, b, p, g = prepared["w"], prepared["b"], prepared["p"], prepared["g"]
    C = prepared["num_classes"]
    B, D = x_flat.shape
    assert w.shape[0] == D
    c_tot = w.shape[1]
    c_out = g.shape[1]

    # Batch tile: sublane-multiple rows; for non-trivial B, >= 2 grid steps so the
    # "parallel" axis actually shards across v7x's 2 TensorCores; large tiles amortize
    # per-step overhead (sweep block_b 256-512).
    block_b = _round_up(max(block_b, 8), 8)
    if B >= 16:
        tb = min(block_b, _round_up(pl.cdiv(B, 2), 8))
    else:
        tb = _round_up(max(B, 1), 8)
    b_pad = _round_up(B, tb)
    x_in = x_flat
    if b_pad != B:
        # Zero-pad rows so no garbage flows through exp/log and output stores stay unmasked.
        x_in = jnp.zeros((b_pad, D), x_flat.dtype).at[:B].set(x_flat)

    grid = (b_pad // tb,)

    # VMEM budget estimate (double-buffered x/out tiles + resident constant blocks +
    # headroom for in-kernel f32 temporaries).  Only override the compiler default when
    # it would exceed v5e's conservative 16 MiB scoped default.
    est = (2 * tb * D * 4                       # x tiles (f32 in, cast in-kernel)
           + 2 * tb * c_out * 4                 # out tiles
           + 2 * D * c_tot * 2                  # resident fused weights (bf16)
           + 2 * (c_tot + c_tot * c_tot + c_tot * c_out) * 4   # bias / P / G
           + 6 * tb * c_tot * 4)                # f32 temporaries headroom
    cp_kwargs = dict(dimension_semantics=("parallel",))
    if est > 12 * 1024 * 1024:
        cp_kwargs["vmem_limit_bytes"] = int(min(2 * est, 100 * 1024 * 1024))

    out_padded = pl.pallas_call(
        ensemble_soft_kernel,
        out_shape=jax.ShapeDtypeStruct((b_pad, c_out), jnp.float32),
        grid_spec=pltpu.PrefetchScalarGridSpec(
            num_scalar_prefetch=0,
            grid=grid,
            in_specs=[
                pl.BlockSpec((tb, D), lambda i: (i, 0)),        # activations (pipelined)
                pl.BlockSpec((D, c_tot), lambda i: (0, 0)),     # fused weights (resident)
                pl.BlockSpec((1, c_tot), lambda i: (0, 0)),     # fused biases (resident)
                pl.BlockSpec((c_tot, c_tot), lambda i: (0, 0)),  # block-diagonal ones (resident)
                pl.BlockSpec((c_tot, c_out), lambda i: (0, 0)),  # class gather / M (resident)
            ],
            out_specs=pl.BlockSpec((tb, c_out), lambda i: (i, 0)),
        ),
        compiler_params=pltpu.CompilerParams(**cp_kwargs),
    )(x_in, w, b, p, g)

    return out_padded[:B, :C]


def reference(x_flat, weights, biases):
    """Pure-JAX reference using the same bf16 matmul / f32 accumulation contract."""
    xb = x_flat.astype(jnp.bfloat16)
    wb = weights.astype(jnp.bfloat16)
    logits = jnp.einsum("bd,mdc->mbc", xb, wb,
                        preferred_element_type=jnp.float32) + biases[:, None, :]
    probs = jax.nn.softmax(logits, axis=-1)
    avg = jnp.mean(probs, axis=0)
    return jnp.log(jnp.maximum(avg, 1e-40))


if __name__ == "__main__":
    # Small shapes consistent with the module's forward (NCHW image input,
    # linear classifier heads producing class logits).
    B, C_in, H, W = 2, 4, 16, 16
    NUM_MODELS = 3
    NUM_CLASSES = 10
    D = C_in * H * W

    key = jax.random.PRNGKey(0)
    kx, kw, kb = jax.random.split(key, 3)

    x = jax.random.normal(kx, (B, C_in, H, W), dtype=jnp.float32)
    x_flat = x.reshape(B, D)  # NCHW flattened row-major -> [B, D] (matches torch .view(B, -1))

    weights = 0.02 * jax.random.normal(kw, (NUM_MODELS, D, NUM_CLASSES), dtype=jnp.float32)
    biases = 0.01 * jax.random.normal(kb, (NUM_MODELS, NUM_CLASSES), dtype=jnp.float32)

    # One-time host-side parameter prep (hoisted out of the per-call path).
    prepared = prepare_ensemble_soft(weights, biases)

    out = ensemble_soft(x_flat, prepared)
    out = jax.block_until_ready(out)

    ref = reference(x_flat, weights, biases)
    assert out.shape == (B, NUM_CLASSES)
    assert jnp.allclose(out, ref, atol=1e-3, rtol=1e-3), float(jnp.max(jnp.abs(out - ref)))

    print("KERNEL_OK")
</pallas_src>

<mosaic_0001>
module attributes {stable_mosaic.version = 11 : i64} {
  func.func @ensemble_soft_kernel(%arg0: i32, %arg1: memref<8x1024xf32, #tpu.memory_space<vmem>>, %arg2: memref<1024x128xbf16, #tpu.memory_space<vmem>>, %arg3: memref<1x128xf32, #tpu.memory_space<vmem>>, %arg4: memref<128x128xf32, #tpu.memory_space<vmem>>, %arg5: memref<128x128xf32, #tpu.memory_space<vmem>>, %arg6: memref<8x128xf32, #tpu.memory_space<vmem>>) attributes {dimension_semantics = [#tpu.dimension_semantics<parallel>], iteration_bounds = array<i64: 1>, scalar_prefetch = 0 : i64, scratch_operands = 0 : i64, tpu.core_type = #tpu.core_type<tc>, window_params = [{transform_indices = @transform_0, window_bounds = array<i64: 8, 1024>}, {pipeline_mode = #tpu.pipeline_mode<synchronous>, transform_indices = @transform_1, window_bounds = array<i64: 1024, 128>}, {pipeline_mode = #tpu.pipeline_mode<synchronous>, transform_indices = @transform_2, window_bounds = array<i64: 1, 128>}, {pipeline_mode = #tpu.pipeline_mode<synchronous>, transform_indices = @transform_3, window_bounds = array<i64: 128, 128>}, {pipeline_mode = #tpu.pipeline_mode<synchronous>, transform_indices = @transform_4, window_bounds = array<i64: 128, 128>}, {transform_indices = @transform_5, window_bounds = array<i64: 8, 128>}]} {
    %c0 = arith.constant 0 : index
    %c0_0 = arith.constant 0 : index
    %0 = vector.load %arg1[%c0, %c0_0] : memref<8x1024xf32, #tpu.memory_space<vmem>>, vector<8x1024xf32>
    %1 = arith.truncf %0 : vector<8x1024xf32> to vector<8x1024xbf16>
    %c0_1 = arith.constant 0 : index
    %c0_2 = arith.constant 0 : index
    %2 = vector.load %arg2[%c0_1, %c0_2] : memref<1024x128xbf16, #tpu.memory_space<vmem>>, vector<1024x128xbf16>
    %cst = arith.constant dense<0.000000e+00> : vector<8x128xf32>
    %3 = tpu.matmul %1, %2, %cst {dimension_numbers = #tpu.dot_dimension_numbers<[1], [0], [0], [1], [0, 0, 1, 1], [], []>} : vector<8x1024xbf16>, vector<1024x128xbf16>, vector<8x128xf32> -> vector<8x128xf32>
    %c0_3 = arith.constant 0 : index
    %c0_4 = arith.constant 0 : index
    %4 = vector.load %arg3[%c0_3, %c0_4] : memref<1x128xf32, #tpu.memory_space<vmem>>, vector<1x128xf32>
    %5 = vector.broadcast %4 : vector<1x128xf32> to vector<8x128xf32>
    %6 = arith.addf %3, %5 : vector<8x128xf32>
    %cst_5 = arith.constant dense<0xFF800000> : vector<8xf32>
    %7 = vector.multi_reduction <maximumf>, %6, %cst_5 [1] : vector<8x128xf32> to vector<8xf32>
    %8 = vector.shape_cast %7 : vector<8xf32> to vector<8x1xf32>
    %9 = vector.broadcast %8 : vector<8x1xf32> to vector<8x128xf32>
    %10 = arith.subf %6, %9 : vector<8x128xf32>
    %11 = math.exp %10 : vector<8x128xf32>
    %c0_6 = arith.constant 0 : index
    %c0_7 = arith.constant 0 : index
    %12 = vector.load %arg4[%c0_6, %c0_7] : memref<128x128xf32, #tpu.memory_space<vmem>>, vector<128x128xf32>
    %cst_8 = arith.constant dense<0.000000e+00> : vector<8x128xf32>
    %13 = tpu.matmul %11, %12, %cst_8 {dimension_numbers = #tpu.dot_dimension_numbers<[1], [0], [0], [1], [0, 0, 1, 1], [], []>} : vector<8x128xf32>, vector<128x128xf32>, vector<8x128xf32> -> vector<8x128xf32>
    %cst_9 = arith.constant 1.000000e-30 : f32
    %14 = vector.broadcast %cst_9 : f32 to vector<8x128xf32>
    %15 = arith.maximumf %13, %14 : vector<8x128xf32>
    %16 = arith.divf %11, %15 : vector<8x128xf32>
    %c0_10 = arith.constant 0 : index
    %c0_11 = arith.constant 0 : index
    %17 = vector.load %arg5[%c0_10, %c0_11] : memref<128x128xf32, #tpu.memory_space<vmem>>, vector<128x128xf32>
    %cst_12 = arith.constant dense<0.000000e+00> : vector<8x128xf32>
    %18 = tpu.matmul %16, %17, %cst_12 {dimension_numbers = #tpu.dot_dimension_numbers<[1], [0], [0], [1], [0, 0, 1, 1], [], []>} : vector<8x128xf32>, vector<128x128xf32>, vector<8x128xf32> -> vector<8x128xf32>
    %cst_13 = arith.constant 9.999940e-41 : f32
    %19 = vector.broadcast %cst_13 : f32 to vector<8x128xf32>
    %20 = arith.maximumf %18, %19 : vector<8x128xf32>
    %21 = math.log %20 : vector<8x128xf32>
    %c0_14 = arith.constant 0 : index
    %c0_15 = arith.constant 0 : index
    %22 = vector.load %arg6[%c0_14, %c0_15] : memref<8x128xf32, #tpu.memory_space<vmem>>, vector<8x128xf32>
    tpu.vector_store %arg6[%c0_14, %c0_15], %21 {strides = array<i32>} : memref<8x128xf32, #tpu.memory_space<vmem>>, vector<8x128xf32>,
    return
  }
  func.func @transform_0(%arg0: i32) -> (i32, i32) {
    %c0_i32 = arith.constant 0 : i32
    %c0_i32_0 = arith.constant 0 : i32
    return %arg0, %c0_i32 : i32, i32
  }
  func.func @transform_1(%arg0: i32) -> (i32, i32) {
    %c0_i32 = arith.constant 0 : i32
    %c0_i32_0 = arith.constant 0 : i32
    %c0_i32_1 = arith.constant 0 : i32
    return %c0_i32, %c0_i32_0 : i32, i32
  }
  func.func @transform_2(%arg0: i32) -> (i32, i32) {
    %c0_i32 = arith.constant 0 : i32
    %c0_i32_0 = arith.constant 0 : i32
    %c0_i32_1 = arith.constant 0 : i32
    return %c0_i32, %c0_i32_0 : i32, i32
  }
  func.func @transform_3(%arg0: i32) -> (i32, i32) {
    %c0_i32 = arith.constant 0 : i32
    %c0_i32_0 = arith.constant 0 : i32
    %c0_i32_1 = arith.constant 0 : i32
    return %c0_i32, %c0_i32_0 : i32, i32
  }
  func.func @transform_4(%arg0: i32) -> (i32, i32) {
    %c0_i32 = arith.constant 0 : i32
    %c0_i32_0 = arith.constant 0 : i32
    %c0_i32_1 = arith.constant 0 : i32
    return %c0_i32, %c0_i32_0 : i32, i32
  }
  func.func @transform_5(%arg0: i32) -> (i32, i32) {
    %c0_i32 = arith.constant 0 : i32
    %c0_i32_0 = arith.constant 0 : i32
    return %arg0, %c0_i32 : i32, i32
  }
}

</mosaic_0001>

<llo_original>
// kernel: tpu_custom_call.1
$region0: #{tpu_custom_call.1}
  #allocation0 [shape = 'u32[]', space=smem, size = 0x4, offset = 0x4, fixed_abs, tag = 'smem constant byte address 0x4 - core index']
  #allocation1 [shape = 'u32[144,128]{1,0:T(1,128)}', space=vmem, size = 0x12000, scoped, tag = 'internal scratch']
  %s0 = inlined_call_operand.hbm [shape: f32[8,1024], index: 0, kind: input, shape index: {}]
  %s1 = inlined_call_operand.hbm [shape: bf16[1024,128], index: 1, kind: input, shape index: {}]
  %s2 = inlined_call_operand.vmem [shape: f32[1,128], index: 2, kind: input, shape index: {}]
  %s3 = inlined_call_operand.hbm [shape: f32[128,128], index: 3, kind: input, shape index: {}]
  %s4 = inlined_call_operand.hbm [shape: f32[128,128], index: 4, kind: input, shape index: {}]
  %s5 = inlined_call_operand.hbm [shape: f32[8,128], index: 5, kind: output, shape index: {}]
  %s6 = sld [smem:[#allocation0]]
  $region46: #{tpu_custom_call.1} parent=0
    _
  %s8 = ssub.s32 1, %s6
  %s9 = scalar_select 0, %s8, %s6
  $region1: #{tpu_custom_call.1} parent=0
    #allocation2 [shape = 'u8[32768]{0}', space=vmem, size = 0x8000, scoped, tag = 'input window, operand 0, single buffered']
    #allocation3 [shape = 's32[1]{0}', space=sflag, size = 0x4, scoped, tag = 'scoped memory for tpu_custom_call.1']
    #allocation4 [shape = 's32[1]{0}', space=sflag, size = 0x4, scoped, tag = 'scoped memory for tpu_custom_call.1']
    #allocation5 [shape = 'u8[262144]{0}', space=vmem, size = 0x40000, scoped, tag = 'input window, operand 1, single buffered']
    #allocation6 [shape = 's32[1]{0}', space=sflag, size = 0x4, scoped, tag = 'scoped memory for tpu_custom_call.1']
    #allocation7 [shape = 'u8[65536]{0}', space=vmem, size = 0x10000, scoped, tag = 'input window, operand 3, single buffered']
    #allocation8 [shape = 'u8[65536]{0}', space=vmem, size = 0x10000, scoped, tag = 'input window, operand 4, single buffered']
    #allocation9 [shape = 's32[1]{0}', space=sflag, size = 0x4, scoped, tag = 'scoped memory for tpu_custom_call.1']
    #allocation10 [shape = 'u8[4096]{0}', space=vmem, size = 0x1000, scoped, tag = 'output window, operand 0, single buffered']
    %10 = vsyncpa [#allocation3], 0
    %11 = vsyncpa [#allocation6], 0
    %12 = vsyncpa [#allocation9], 0
    %13 = vsyncpa [#allocation4], 0
    // Predicated region
    $region2: #{tpu_custom_call.1} parent=1 // pred_check
      _
    $region3: #{tpu_custom_call.1} parent=1 // pred_check_branch
      %15 = sbr.rel (0) target = $region5
    $region4: #{tpu_custom_call.1} parent=1 // pred_region
      %s17 = ssub.s32 1024, 1024
      %18 = vsyncadd [#allocation3], %s17
      %s20 = sshll.u32 [#allocation2], 4
      %s21 = int_to_ptr.vmem [resolvable:$true] %s20
      %23 = dma.hbm_to_vmem [thread:$0]  %s0, 1024, %s21, [#allocation3]
    $region5: #{tpu_custom_call.1} parent=1 // pred_fallthru
      _
    // Predicated region
    $region6: #{tpu_custom_call.1} parent=1 // pred_check
      _
    $region7: #{tpu_custom_call.1} parent=1 // pred_check_branch
      %25 = sbr.rel (0) target = $region9
    $region8: #{tpu_custom_call.1} parent=1 // pred_region
      %s27 = ssub.s32 8192, 8192
      %28 = vsyncadd [#allocation6], %s27
      %s29 = sshll.u32 [#allocation5], 4
      %s30 = int_to_ptr.vmem [resolvable:$true] %s29
      %35 = dma.hbm_to_vmem [thread:$0]  %s1, 8192, %s30, [#allocation6], 64, 64, 4
    $region9: #{tpu_custom_call.1} parent=1 // pred_fallthru
      _
    // Predicated region
    $region10: #{tpu_custom_call.1} parent=1 // pred_check
      _
    $region11: #{tpu_custom_call.1} parent=1 // pred_check_branch
      %37 = sbr.rel (0) target = $region13
    $region12: #{tpu_custom_call.1} parent=1 // pred_region
      _
    $region13: #{tpu_custom_call.1} parent=1 // pred_fallthru
      _
    // Predicated region
    $region14: #{tpu_custom_call.1} parent=1 // pred_check
      _
    $region15: #{tpu_custom_call.1} parent=1 // pred_check_branch
      %39 = sbr.rel (0) target = $region17
    $region16: #{tpu_custom_call.1} parent=1 // pred_region
      %s41 = ssub.s32 2048, 2048
      %42 = vsyncadd [#allocation6], %s41
      %s43 = sshll.u32 [#allocation7], 4
      %s44 = int_to_ptr.vmem [resolvable:$true] %s43
      %49 = dma.hbm_to_vmem [thread:$0]  %s3, 2048, %s44, [#allocation6], 128, 128, 8
    $region17: #{tpu_custom_call.1} parent=1 // pred_fallthru
      _
    // Predicated region
    $region18: #{tpu_custom_call.1} parent=1 // pred_check
      _
    $region19: #{tpu_custom_call.1} parent=1 // pred_check_branch
      %51 = sbr.rel (0) target = $region21
    $region20: #{tpu_custom_call.1} parent=1 // pred_region
      %s53 = ssub.s32 2048, 2048
      %54 = vsyncadd [#allocation9], %s53
      %s55 = sshll.u32 [#allocation8], 4
      %s56 = int_to_ptr.vmem [resolvable:$true] %s55
      %61 = dma.hbm_to_vmem [thread:$0]  %s4, 2048, %s56, [#allocation9], 128, 128, 8
    $region21: #{tpu_custom_call.1} parent=1 // pred_fallthru
      _
    // Predicated region
    $region22: #{tpu_custom_call.1} parent=1 // pred_check
      _
    $region23: #{tpu_custom_call.1} parent=1 // pred_check_branch
      %63 = sbr.rel (0) target = $region25
    $region24: #{tpu_custom_call.1} parent=1 // pred_region
      %64 = dma.done [#allocation3], 1024
    $region25: #{tpu_custom_call.1} parent=1 // pred_fallthru
      _
    // Predicated region
    $region26: #{tpu_custom_call.1} parent=1 // pred_check
      _
    $region27: #{tpu_custom_call.1} parent=1 // pred_check_branch
      %66 = sbr.rel (0) target = $region29
    $region28: #{tpu_custom_call.1} parent=1 // pred_region
      %67 = dma.done [#allocation6], 8192
    $region29: #{tpu_custom_call.1} parent=1 // pred_fallthru
      _
    // Predicated region
    $region30: #{tpu_custom_call.1} parent=1 // pred_check
      _
    $region31: #{tpu_custom_call.1} parent=1 // pred_check_branch
      %69 = sbr.rel (0) target = $region33
    $region32: #{tpu_custom_call.1} parent=1 // pred_region
      %70 = dma.done [#allocation6], 2048
    $region33: #{tpu_custom_call.1} parent=1 // pred_fallthru
      _
    // Predicated region
    $region34: #{tpu_custom_call.1} parent=1 // pred_check
      _
    $region35: #{tpu_custom_call.1} parent=1 // pred_check_branch
      %72 = sbr.rel (0) target = $region37
    $region36: #{tpu_custom_call.1} parent=1 // pred_region
      %73 = dma.done [#allocation9], 2048
    $region37: #{tpu_custom_call.1} parent=1 // pred_fallthru
      _
    %v75 = vld [vmem:[#allocation2] sm:$0xff]
    %v76 = vld [vmem:[#allocation2 + $0x8] sm:$0xff]
    %v77 = vld [vmem:[#allocation2 + $0x10] sm:$0xff]
    %v78 = vld [vmem:[#allocation2 + $0x18] sm:$0xff]
    %v79 = vld [vmem:[#allocation2 + $0x20] sm:$0xff]
    %v80 = vld [vmem:[#allocation2 + $0x28] sm:$0xff]
    %v81 = vld [vmem:[#allocation2 + $0x30] sm:$0xff]
    %v82 = vld [vmem:[#allocation2 + $0x38] sm:$0xff]
    %v83 = vpack.c.bf16 %v75, %v75
    %v84 = vpack.c.bf16 %v76, %v76
    %v85 = vpack.c.bf16 %v77, %v77
    %v86 = vpack.c.bf16 %v78, %v78
    %v87 = vpack.c.bf16 %v79, %v79
    %v88 = vpack.c.bf16 %v80, %v80
    %v89 = vpack.c.bf16 %v81, %v81
    %v90 = vpack.c.bf16 %v82, %v82
    %v91 = vld [vmem:[#allocation5] sm:$0xf]
    %v92 = vld [vmem:[#allocation5 + $0x4] sm:$0xf]
    %v93 = vld [vmem:[#allocation5 + $0x8] sm:$0xf]
    %v94 = vld [vmem:[#allocation5 + $0xc] sm:$0xf]
    %v95 = vld [vmem:[#allocation5 + $0x10] sm:$0xf]
    %v96 = vld [vmem:[#allocation5 + $0x14] sm:$0xf]
    %v97 = vld [vmem:[#allocation5 + $0x18] sm:$0xf]
    %v98 = vld [vmem:[#allocation5 + $0x1c] sm:$0xf]
    %v99 = vld [vmem:[#allocation5 + $0x20] sm:$0xf]
    %v100 = vld [vmem:[#allocation5 + $0x24] sm:$0xf]
    %v101 = vld [vmem:[#allocation5 + $0x28] sm:$0xf]
    %v102 = vld [vmem:[#allocation5 + $0x2c] sm:$0xf]
    %v103 = vld [vmem:[#allocation5 + $0x30] sm:$0xf]
    %v104 = vld [vmem:[#allocation5 + $0x34] sm:$0xf]
    %v105 = vld [vmem:[#allocation5 + $0x38] sm:$0xf]
    %v106 = vld [vmem:[#allocation5 + $0x3c] sm:$0xf]
    %v107 = vld [vmem:[#allocation5 + $0x40] sm:$0xf]
    %v108 = vld [vmem:[#allocation5 + $0x44] sm:$0xf]
    %v109 = vld [vmem:[#allocation5 + $0x48] sm:$0xf]
    %v110 = vld [vmem:[#allocation5 + $0x4c] sm:$0xf]
    %v111 = vld [vmem:[#allocation5 + $0x50] sm:$0xf]
    %v112 = vld [vmem:[#allocation5 + $0x54] sm:$0xf]
    %v113 = vld [vmem:[#allocation5 + $0x58] sm:$0xf]
    %v114 = vld [vmem:[#allocation5 + $0x5c] sm:$0xf]
    %v115 = vld [vmem:[#allocation5 + $0x60] sm:$0xf]
    %v116 = vld [vmem:[#allocation5 + $0x64] sm:$0xf]
    %v117 = vld [vmem:[#allocation5 + $0x68] sm:$0xf]
    %v118 = vld [vmem:[#allocation5 + $0x6c] sm:$0xf]
    %v119 = vld [vmem:[#allocation5 + $0x70] sm:$0xf]
    %v120 = vld [vmem:[#allocation5 + $0x74] sm:$0xf]
    %v121 = vld [vmem:[#allocation5 + $0x78] sm:$0xf]
    %v122 = vld [vmem:[#allocation5 + $0x7c] sm:$0xf]
    %v123 = vld [vmem:[#allocation5 + $0x80] sm:$0xf]
    %v124 = vld [vmem:[#allocation5 + $0x84] sm:$0xf]
    %v125 = vld [vmem:[#allocation5 + $0x88] sm:$0xf]
    %v126 = vld [vmem:[#allocation5 + $0x8c] sm:$0xf]
    %v127 = vld [vmem:[#allocation5 + $0x90] sm:$0xf]
    %v128 = vld [vmem:[#allocation5 + $0x94] sm:$0xf]
    %v129 = vld [vmem:[#allocation5 + $0x98] sm:$0xf]
    %v130 = vld [vmem:[#allocation5 + $0x9c] sm:$0xf]
    %v131 = vld [vmem:[#allocation5 + $0xa0] sm:$0xf]
    %v132 = vld [vmem:[#allocation5 + $0xa4] sm:$0xf]
    %v133 = vld [vmem:[#allocation5 + $0xa8] sm:$0xf]
    %v134 = vld [vmem:[#allocation5 + $0xac] sm:$0xf]
    %v135 = vld [vmem:[#allocation5 + $0xb0] sm:$0xf]
    %v136 = vld [vmem:[#allocation5 + $0xb4] sm:$0xf]
    %v137 = vld [vmem:[#allocation5 + $0xb8] sm:$0xf]
    %v138 = vld [vmem:[#allocation5 + $0xbc] sm:$0xf]
    %v139 = vld [vmem:[#allocation5 + $0xc0] sm:$0xf]
    %v140 = vld [vmem:[#allocation5 + $0xc4] sm:$0xf]
    %v141 = vld [vmem:[#allocation5 + $0xc8] sm:$0xf]
    %v142 = vld [vmem:[#allocation5 + $0xcc] sm:$0xf]
    %v143 = vld [vmem:[#allocation5 + $0xd0] sm:$0xf]
    %v144 = vld [vmem:[#allocation5 + $0xd4] sm:$0xf]
    %v145 = vld [vmem:[#allocation5 + $0xd8] sm:$0xf]
    %v146 = vld [vmem:[#allocation5 + $0xdc] sm:$0xf]
    %v147 = vld [vmem:[#allocation5 + $0xe0] sm:$0xf]
    %v148 = vld [vmem:[#allocation5 + $0xe4] sm:$0xf]
    %v149 = vld [vmem:[#allocation5 + $0xe8] sm:$0xf]
    %v150 = vld [vmem:[#allocation5 + $0xec] sm:$0xf]
    %v151 = vld [vmem:[#allocation5 + $0xf0] sm:$0xf]
    %v152 = vld [vmem:[#allocation5 + $0xf4] sm:$0xf]
    %v153 = vld [vmem:[#allocation5 + $0xf8] sm:$0xf]
    %v154 = vld [vmem:[#allocation5 + $0xfc] sm:$0xf]
    %v155 = vld [vmem:[#allocation5 + $0x100] sm:$0xf]
    %v156 = vld [vmem:[#allocation5 + $0x104] sm:$0xf]
    %v157 = vld [vmem:[#allocation5 + $0x108] sm:$0xf]
    %v158 = vld [vmem:[#allocation5 + $0x10c] sm:$0xf]
    %v159 = vld [vmem:[#allocation5 + $0x110] sm:$0xf]
    %v160 = vld [vmem:[#allocation5 + $0x114] sm:$0xf]
    %v161 = vld [vmem:[#allocation5 + $0x118] sm:$0xf]
    %v162 = vld [vmem:[#allocation5 + $0x11c] sm:$0xf]
    %v163 = vld [vmem:[#allocation5 + $0x120] sm:$0xf]
    %v164 = vld [vmem:[#allocation5 + $0x124] sm:$0xf]
    %v165 = vld [vmem:[#allocation5 + $0x128] sm:$0xf]
    %v166 = vld [vmem:[#allocation5 + $0x12c] sm:$0xf]
    %v167 = vld [vmem:[#allocation5 + $0x130] sm:$0xf]
    %v168 = vld [vmem:[#allocation5 + $0x134] sm:$0xf]
    %v169 = vld [vmem:[#allocation5 + $0x138] sm:$0xf]
    %v170 = vld [vmem:[#allocation5 + $0x13c] sm:$0xf]
    %v171 = vld [vmem:[#allocation5 + $0x140] sm:$0xf]
    %v172 = vld [vmem:[#allocation5 + $0x144] sm:$0xf]
    %v173 = vld [vmem:[#allocation5 + $0x148] sm:$0xf]
    %v174 = vld [vmem:[#allocation5 + $0x14c] sm:$0xf]
    %v175 = vld [vmem:[#allocation5 + $0x150] sm:$0xf]
    %v176 = vld [vmem:[#allocation5 + $0x154] sm:$0xf]
    %v177 = vld [vmem:[#allocation5 + $0x158] sm:$0xf]
    %v178 = vld [vmem:[#allocation5 + $0x15c] sm:$0xf]
    %v179 = vld [vmem:[#allocation5 + $0x160] sm:$0xf]
    %v180 = vld [vmem:[#allocation5 + $0x164] sm:$0xf]
    %v181 = vld [vmem:[#allocation5 + $0x168] sm:$0xf]
    %v182 = vld [vmem:[#allocation5 + $0x16c] sm:$0xf]
    %v183 = vld [vmem:[#allocation5 + $0x170] sm:$0xf]
    %v184 = vld [vmem:[#allocation5 + $0x174] sm:$0xf]
    %v185 = vld [vmem:[#allocation5 + $0x178] sm:$0xf]
    %v186 = vld [vmem:[#allocation5 + $0x17c] sm:$0xf]
    %v187 = vld [vmem:[#allocation5 + $0x180] sm:$0xf]
    %v188 = vld [vmem:[#allocation5 + $0x184] sm:$0xf]
    %v189 = vld [vmem:[#allocation5 + $0x188] sm:$0xf]
    %v190 = vld [vmem:[#allocation5 + $0x18c] sm:$0xf]
    %v191 = vld [vmem:[#allocation5 + $0x190] sm:$0xf]
    %v192 = vld [vmem:[#allocation5 + $0x194] sm:$0xf]
    %v193 = vld [vmem:[#allocation5 + $0x198] sm:$0xf]
    %v194 = vld [vmem:[#allocation5 + $0x19c] sm:$0xf]
    %v195 = vld [vmem:[#allocation5 + $0x1a0] sm:$0xf]
    %v196 = vld [vmem:[#allocation5 + $0x1a4] sm:$0xf]
    %v197 = vld [vmem:[#allocation5 + $0x1a8] sm:$0xf]
    %v198 = vld [vmem:[#allocation5 + $0x1ac] sm:$0xf]
    %v199 = vld [vmem:[#allocation5 + $0x1b0] sm:$0xf]
    %v200 = vld [vmem:[#allocation5 + $0x1b4] sm:$0xf]
    %v201 = vld [vmem:[#allocation5 + $0x1b8] sm:$0xf]
    %v202 = vld [vmem:[#allocation5 + $0x1bc] sm:$0xf]
    %v203 = vld [vmem:[#allocation5 + $0x1c0] sm:$0xf]
    %v204 = vld [vmem:[#allocation5 + $0x1c4] sm:$0xf]
    %v205 = vld [vmem:[#allocation5 + $0x1c8] sm:$0xf]
    %v206 = vld [vmem:[#allocation5 + $0x1cc] sm:$0xf]
    %v207 = vld [vmem:[#allocation5 + $0x1d0] sm:$0xf]
    %v208 = vld [vmem:[#allocation5 + $0x1d4] sm:$0xf]
    %v209 = vld [vmem:[#allocation5 + $0x1d8] sm:$0xf]
    %v210 = vld [vmem:[#allocation5 + $0x1dc] sm:$0xf]
    %v211 = vld [vmem:[#allocation5 + $0x1e0] sm:$0xf]
    %v212 = vld [vmem:[#allocation5 + $0x1e4] sm:$0xf]
    %v213 = vld [vmem:[#allocation5 + $0x1e8] sm:$0xf]
    %v214 = vld [vmem:[#allocation5 + $0x1ec] sm:$0xf]
    %v215 = vld [vmem:[#allocation5 + $0x1f0] sm:$0xf]
    %v216 = vld [vmem:[#allocation5 + $0x1f4] sm:$0xf]
    %v217 = vld [vmem:[#allocation5 + $0x1f8] sm:$0xf]
    %v218 = vld [vmem:[#allocation5 + $0x1fc] sm:$0xf]
    %v219 = vld [vmem:[%s2] sm:$0x1]
    %v221 = vlaneseq
    %v222 = vshrl.u32 %v221, 7
    %v223 = vsub.s32 0, %v222
    %v224 = vrot.slane %v219, %v223
    %v354 = vunpack.c.l.b16 %v91
    %v355 = vunpack.c.l.b16 %v92
    %v356 = vunpack.c.l.b16 %v93
    %v357 = vunpack.c.l.b16 %v94
    %v358 = vunpack.c.l.b16 %v95
    %v359 = vunpack.c.l.b16 %v96
    %v360 = vunpack.c.l.b16 %v97
    %v361 = vunpack.c.l.b16 %v98
    %v362 = vunpack.c.l.b16 %v99
    %v363 = vunpack.c.l.b16 %v100
    %v364 = vunpack.c.l.b16 %v101
    %v365 = vunpack.c.l.b16 %v102
    %v366 = vunpack.c.l.b16 %v103
    %v367 = vunpack.c.l.b16 %v104
    %v368 = vunpack.c.l.b16 %v105
    %v369 = vunpack.c.l.b16 %v106
    %v370 = vunpack.c.l.b16 %v107
    %v371 = vunpack.c.l.b16 %v108
    %v372 = vunpack.c.l.b16 %v109
    %v373 = vunpack.c.l.b16 %v110
    %v374 = vunpack.c.l.b16 %v111
    %v375 = vunpack.c.l.b16 %v112
    %v376 = vunpack.c.l.b16 %v113
    %v377 = vunpack.c.l.b16 %v114
    %v378 = vunpack.c.l.b16 %v115
    %v379 = vunpack.c.l.b16 %v116
    %v380 = vunpack.c.l.b16 %v117
    %v381 = vunpack.c.l.b16 %v118
    %v382 = vunpack.c.l.b16 %v119
    %v383 = vunpack.c.l.b16 %v120
    %v384 = vunpack.c.l.b16 %v121
    %v385 = vunpack.c.l.b16 %v122
    %v386 = vunpack.c.l.b16 %v123
    %v387 = vunpack.c.l.b16 %v124
    %v388 = vunpack.c.l.b16 %v125
    %v389 = vunpack.c.l.b16 %v126
    %v390 = vunpack.c.l.b16 %v127
    %v391 = vunpack.c.l.b16 %v128
    %v392 = vunpack.c.l.b16 %v129
    %v393 = vunpack.c.l.b16 %v130
    %v394 = vunpack.c.l.b16 %v131
    %v395 = vunpack.c.l.b16 %v132
    %v396 = vunpack.c.l.b16 %v133
    %v397 = vunpack.c.l.b16 %v134
    %v398 = vunpack.c.l.b16 %v135
    %v399 = vunpack.c.l.b16 %v136
    %v400 = vunpack.c.l.b16 %v137
    %v401 = vunpack.c.l.b16 %v138
    %v402 = vunpack.c.l.b16 %v139
    %v403 = vunpack.c.l.b16 %v140
    %v404 = vunpack.c.l.b16 %v141
    %v405 = vunpack.c.l.b16 %v142
    %v406 = vunpack.c.l.b16 %v143
    %v407 = vunpack.c.l.b16 %v144
    %v408 = vunpack.c.l.b16 %v145
    %v409 = vunpack.c.l.b16 %v146
    %v410 = vunpack.c.l.b16 %v147
    %v411 = vunpack.c.l.b16 %v148
    %v412 = vunpack.c.l.b16 %v149
    %v413 = vunpack.c.l.b16 %v150
    %v414 = vunpack.c.l.b16 %v151
    %v415 = vunpack.c.l.b16 %v152
    %v416 = vunpack.c.l.b16 %v153
    %v417 = vunpack.c.l.b16 %v154
    %v418 = vunpack.c.l.b16 %v155
    %v419 = vunpack.c.l.b16 %v156
    %v420 = vunpack.c.l.b16 %v157
    %v421 = vunpack.c.l.b16 %v158
    %v422 = vunpack.c.l.b16 %v159
    %v423 = vunpack.c.l.b16 %v160
    %v424 = vunpack.c.l.b16 %v161
    %v425 = vunpack.c.l.b16 %v162
    %v426 = vunpack.c.l.b16 %v163
    %v427 = vunpack.c.l.b16 %v164
    %v428 = vunpack.c.l.b16 %v165
    %v429 = vunpack.c.l.b16 %v166
    %v430 = vunpack.c.l.b16 %v167
    %v431 = vunpack.c.l.b16 %v168
    %v432 = vunpack.c.l.b16 %v169
    %v433 = vunpack.c.l.b16 %v170
    %v434 = vunpack.c.l.b16 %v171
    %v435 = vunpack.c.l.b16 %v172
    %v436 = vunpack.c.l.b16 %v173
    %v437 = vunpack.c.l.b16 %v174
    %v438 = vunpack.c.l.b16 %v175
    %v439 = vunpack.c.l.b16 %v176
    %v440 = vunpack.c.l.b16 %v177
    %v441 = vunpack.c.l.b16 %v178
    %v442 = vunpack.c.l.b16 %v179
    %v443 = vunpack.c.l.b16 %v180
    %v444 = vunpack.c.l.b16 %v181
    %v445 = vunpack.c.l.b16 %v182
    %v446 = vunpack.c.l.b16 %v183
    %v447 = vunpack.c.l.b16 %v184
    %v448 = vunpack.c.l.b16 %v185
    %v449 = vunpack.c.l.b16 %v186
    %v450 = vunpack.c.l.b16 %v187
    %v451 = vunpack.c.l.b16 %v188
    %v452 = vunpack.c.l.b16 %v189
    %v453 = vunpack.c.l.b16 %v190
    %v454 = vunpack.c.l.b16 %v191
    %v455 = vunpack.c.l.b16 %v192
    %v456 = vunpack.c.l.b16 %v193
    %v457 = vunpack.c.l.b16 %v194
    %v458 = vunpack.c.l.b16 %v195
    %v459 = vunpack.c.l.b16 %v196
    %v460 = vunpack.c.l.b16 %v197
    %v461 = vunpack.c.l.b16 %v198
    %v462 = vunpack.c.l.b16 %v199
    %v463 = vunpack.c.l.b16 %v200
    %v464 = vunpack.c.l.b16 %v201
    %v465 = vunpack.c.l.b16 %v202
    %v466 = vunpack.c.l.b16 %v203
    %v467 = vunpack.c.l.b16 %v204
    %v468 = vunpack.c.l.b16 %v205
    %v469 = vunpack.c.l.b16 %v206
    %v470 = vunpack.c.l.b16 %v207
    %v471 = vunpack.c.l.b16 %v208
    %v472 = vunpack.c.l.b16 %v209
    %v473 = vunpack.c.l.b16 %v210
    %v474 = vunpack.c.l.b16 %v211
    %v475 = vunpack.c.l.b16 %v212
    %v476 = vunpack.c.l.b16 %v213
    %v477 = vunpack.c.l.b16 %v214
    %v478 = vunpack.c.l.b16 %v215
    %v479 = vunpack.c.l.b16 %v216
    %v480 = vunpack.c.l.b16 %v217
    %v481 = vunpack.c.l.b16 %v218
    %v482 = vpack.c.b16 %v355, %v354
    %v483 = vpack.c.b16 %v357, %v356
    %v484 = vpack.c.b16 %v359, %v358
    %v485 = vpack.c.b16 %v361, %v360
    %v486 = vpack.c.b16 %v363, %v362
    %v487 = vpack.c.b16 %v365, %v364
    %v488 = vpack.c.b16 %v367, %v366
    %v489 = vpack.c.b16 %v369, %v368
    %v490 = vpack.c.b16 %v371, %v370
    %v491 = vpack.c.b16 %v373, %v372
    %v492 = vpack.c.b16 %v375, %v374
    %v493 = vpack.c.b16 %v377, %v376
    %v494 = vpack.c.b16 %v379, %v378
    %v495 = vpack.c.b16 %v381, %v380
    %v496 = vpack.c.b16 %v383, %v382
    %v497 = vpack.c.b16 %v385, %v384
    %v498 = vpack.c.b16 %v387, %v386
    %v499 = vpack.c.b16 %v389, %v388
    %v500 = vpack.c.b16 %v391, %v390
    %v501 = vpack.c.b16 %v393, %v392
    %v502 = vpack.c.b16 %v395, %v394
    %v503 = vpack.c.b16 %v397, %v396
    %v504 = vpack.c.b16 %v399, %v398
    %v505 = vpack.c.b16 %v401, %v400
    %v506 = vpack.c.b16 %v403, %v402
    %v507 = vpack.c.b16 %v405, %v404
    %v508 = vpack.c.b16 %v407, %v406
    %v509 = vpack.c.b16 %v409, %v408
    %v510 = vpack.c.b16 %v411, %v410
    %v511 = vpack.c.b16 %v413, %v412
    %v512 = vpack.c.b16 %v415, %v414
    %v513 = vpack.c.b16 %v417, %v416
    %v514 = vpack.c.b16 %v419, %v418
    %v515 = vpack.c.b16 %v421, %v420
    %v516 = vpack.c.b16 %v423, %v422
    %v517 = vpack.c.b16 %v425, %v424
    %v518 = vpack.c.b16 %v427, %v426
    %v519 = vpack.c.b16 %v429, %v428
    %v520 = vpack.c.b16 %v431, %v430
    %v521 = vpack.c.b16 %v433, %v432
    %v522 = vpack.c.b16 %v435, %v434
    %v523 = vpack.c.b16 %v437, %v436
    %v524 = vpack.c.b16 %v439, %v438
    %v525 = vpack.c.b16 %v441, %v440
    %v526 = vpack.c.b16 %v443, %v442
    %v527 = vpack.c.b16 %v445, %v444
    %v528 = vpack.c.b16 %v447, %v446
    %v529 = vpack.c.b16 %v449, %v448
    %v530 = vpack.c.b16 %v451, %v450
    %v531 = vpack.c.b16 %v453, %v452
    %v532 = vpack.c.b16 %v455, %v454
    %v533 = vpack.c.b16 %v457, %v456
    %v534 = vpack.c.b16 %v459, %v458
    %v535 = vpack.c.b16 %v461, %v460
    %v536 = vpack.c.b16 %v463, %v462
    %v537 = vpack.c.b16 %v465, %v464
    %v538 = vpack.c.b16 %v467, %v466
    %v539 = vpack.c.b16 %v469, %v468
    %v540 = vpack.c.b16 %v471, %v470
    %v541 = vpack.c.b16 %v473, %v472
    %v542 = vpack.c.b16 %v475, %v474
    %v543 = vpack.c.b16 %v477, %v476
    %v544 = vpack.c.b16 %v479, %v478
    %v545 = vpack.c.b16 %v481, %v480
    %610 = vmatprep.subr.bf16.mxu0 0
    %611 = vmatpush1.bf16.msra.mxu0 %v482
    %612 = vmatprep.subr.bf16.mxu0 0
    %613 = vmatpush1.bf16.msra.mxu0 %v483
    %614 = vmatprep.subr.bf16.mxu0 0
    %615 = vmatpush1.bf16.msra.mxu0 %v484
    %616 = vmatprep.subr.bf16.mxu0 0
    %617 = vmatpush1.bf16.msra.mxu0 %v485
    %618 = vmatprep.subr.bf16.mxu0 0
    %619 = vmatpush1.bf16.msra.mxu0 %v486
    %620 = vmatprep.subr.bf16.mxu0 0
    %621 = vmatpush1.bf16.msra.mxu0 %v487
    %622 = vmatprep.subr.bf16.mxu0 0
    %623 = vmatpush1.bf16.msra.mxu0 %v488
    %624 = vmatprep.subr.bf16.mxu0 0
    %625 = vmatpush1.bf16.msra.mxu0 %v489
    %626 = vmatprep.subr.bf16.mxu0 0
    %627 = vmatpush1.bf16.msra.mxu0 %v490
    %628 = vmatprep.subr.bf16.mxu0 0
    %629 = vmatpush1.bf16.msra.mxu0 %v491
    %630 = vmatprep.subr.bf16.mxu0 0
    %631 = vmatpush1.bf16.msra.mxu0 %v492
    %632 = vmatprep.subr.bf16.mxu0 0
    %633 = vmatpush1.bf16.msra.mxu0 %v493
    %634 = vmatprep.subr.bf16.mxu0 0
    %635 = vmatpush1.bf16.msra.mxu0 %v494
    %636 = vmatprep.subr.bf16.mxu0 0
    %637 = vmatpush1.bf16.msra.mxu0 %v495
    %638 = vmatprep.subr.bf16.mxu0 0
    %639 = vmatpush1.bf16.msra.mxu0 %v496
    %640 = vmatprep.subr.bf16.mxu0 0
    %641 = vmatpush1.bf16.msra.mxu0 %v497
    %642 = vmatprep.mubr.bf16.mxu0 %v84
    %643 = vmatmul.mubr.bf16.gmra.mrb[0].mxu0 %v83
    %v644 = vpop.f32.mrb[0].mxu0
    %v645 = vadd.f32 %v224, %v644
    %v646 = vpop.f32.mrb[0].mxu0
    %v647 = vpop.f32.mrb[0].mxu0
    %v648 = vpop.f32.mrb[0].mxu0
    %649 = vdwg.mxu0
    %650 = vmatprep.subr.bf16.mxu0 0
    %651 = vmatpush1.bf16.msra.mxu0 %v498
    %652 = vmatprep.subr.bf16.mxu0 0
    %653 = vmatpush1.bf16.msra.mxu0 %v499
    %654 = vmatprep.subr.bf16.mxu0 0
    %655 = vmatpush1.bf16.msra.mxu0 %v500
    %656 = vmatprep.subr.bf16.mxu0 0
    %657 = vmatpush1.bf16.msra.mxu0 %v501
    %658 = vmatprep.subr.bf16.mxu0 0
    %659 = vmatpush1.bf16.msra.mxu0 %v502
    %660 = vmatprep.subr.bf16.mxu0 0
    %661 = vmatpush1.bf16.msra.mxu0 %v503
    %662 = vmatprep.subr.bf16.mxu0 0
    %663 = vmatpush1.bf16.msra.mxu0 %v504
    %664 = vmatprep.subr.bf16.mxu0 0
    %665 = vmatpush1.bf16.msra.mxu0 %v505
    %666 = vmatprep.subr.bf16.mxu0 0
    %667 = vmatpush1.bf16.msra.mxu0 %v506
    %668 = vmatprep.subr.bf16.mxu0 0
    %669 = vmatpush1.bf16.msra.mxu0 %v507
    %670 = vmatprep.subr.bf16.mxu0 0
    %671 = vmatpush1.bf16.msra.mxu0 %v508
    %672 = vmatprep.subr.bf16.mxu0 0
    %673 = vmatpush1.bf16.msra.mxu0 %v509
    %674 = vmatprep.subr.bf16.mxu0 0
    %675 = vmatpush1.bf16.msra.mxu0 %v510
    %676 = vmatprep.subr.bf16.mxu0 0
    %677 = vmatpush1.bf16.msra.mxu0 %v511
    %678 = vmatprep.subr.bf16.mxu0 0
    %679 = vmatpush1.bf16.msra.mxu0 %v512
    %680 = vmatprep.subr.bf16.mxu0 0
    %681 = vmatpush1.bf16.msra.mxu0 %v513
    %682 = vmatprep.mubr.bf16.mxu0 %v86
    %683 = vmatmul.mubr.bf16.gmra.mrb[0].mxu0 %v85
    %v684 = vpop.f32.mrb[0].mxu0
    %v685 = vadd.f32 %v645, %v684
    %v686 = vpop.f32.mrb[0].mxu0
    %v687 = vpop.f32.mrb[0].mxu0
    %v688 = vpop.f32.mrb[0].mxu0
    %689 = vdwg.mxu0
    %690 = vmatprep.subr.bf16.mxu0 0
    %691 = vmatpush1.bf16.msra.mxu0 %v514
    %692 = vmatprep.subr.bf16.mxu0 0
    %693 = vmatpush1.bf16.msra.mxu0 %v515
    %694 = vmatprep.subr.bf16.mxu0 0
    %695 = vmatpush1.bf16.msra.mxu0 %v516
    %696 = vmatprep.subr.bf16.mxu0 0
    %697 = vmatpush1.bf16.msra.mxu0 %v517
    %698 = vmatprep.subr.bf16.mxu0 0
    %699 = vmatpush1.bf16.msra.mxu0 %v518
    %700 = vmatprep.subr.bf16.mxu0 0
    %701 = vmatpush1.bf16.msra.mxu0 %v519
    %702 = vmatprep.subr.bf16.mxu0 0
    %703 = vmatpush1.bf16.msra.mxu0 %v520
    %704 = vmatprep.subr.bf16.mxu0 0
    %705 = vmatpush1.bf16.msra.mxu0 %v521
    %706 = vmatprep.subr.bf16.mxu0 0
    %707 = vmatpush1.bf16.msra.mxu0 %v522
    %708 = vmatprep.subr.bf16.mxu0 0
    %709 = vmatpush1.bf16.msra.mxu0 %v523
    %710 = vmatprep.subr.bf16.mxu0 0
    %711 = vmatpush1.bf16.msra.mxu0 %v524
    %712 = vmatprep.subr.bf16.mxu0 0
    %713 = vmatpush1.bf16.msra.mxu0 %v525
    %714 = vmatprep.subr.bf16.mxu0 0
    %715 = vmatpush1.bf16.msra.mxu0 %v526
    %716 = vmatprep.subr.bf16.mxu0 0
    %717 = vmatpush1.bf16.msra.mxu0 %v527
    %718 = vmatprep.subr.bf16.mxu0 0
    %719 = vmatpush1.bf16.msra.mxu0 %v528
    %720 = vmatprep.subr.bf16.mxu0 0
    %721 = vmatpush1.bf16.msra.mxu0 %v529
    %722 = vmatprep.mubr.bf16.mxu0 %v88
    %723 = vmatmul.mubr.bf16.gmra.mrb[0].mxu0 %v87
    %v724 = vpop.f32.mrb[0].mxu0
    %v725 = vadd.f32 %v685, %v724
    %v726 = vpop.f32.mrb[0].mxu0
    %v727 = vpop.f32.mrb[0].mxu0
    %v728 = vpop.f32.mrb[0].mxu0
    %729 = vdwg.mxu0
    %730 = vmatprep.subr.bf16.mxu0 0
    %731 = vmatpush1.bf16.msra.mxu0 %v530
    %732 = vmatprep.subr.bf16.mxu0 0
    %733 = vmatpush1.bf16.msra.mxu0 %v531
    %734 = vmatprep.subr.bf16.mxu0 0
    %735 = vmatpush1.bf16.msra.mxu0 %v532
    %736 = vmatprep.subr.bf16.mxu0 0
    %737 = vmatpush1.bf16.msra.mxu0 %v533
    %738 = vmatprep.subr.bf16.mxu0 0
    %739 = vmatpush1.bf16.msra.mxu0 %v534
    %740 = vmatprep.subr.bf16.mxu0 0
    %741 = vmatpush1.bf16.msra.mxu0 %v535
    %742 = vmatprep.subr.bf16.mxu0 0
    %743 = vmatpush1.bf16.msra.mxu0 %v536
    %744 = vmatprep.subr.bf16.mxu0 0
    %745 = vmatpush1.bf16.msra.mxu0 %v537
    %746 = vmatprep.subr.bf16.mxu0 0
    %747 = vmatpush1.bf16.msra.mxu0 %v538
    %748 = vmatprep.subr.bf16.mxu0 0
    %749 = vmatpush1.bf16.msra.mxu0 %v539
    %750 = vmatprep.subr.bf16.mxu0 0
    %751 = vmatpush1.bf16.msra.mxu0 %v540
    %752 = vmatprep.subr.bf16.mxu0 0
    %753 = vmatpush1.bf16.msra.mxu0 %v541
    %754 = vmatprep.subr.bf16.mxu0 0
    %755 = vmatpush1.bf16.msra.mxu0 %v542
    %756 = vmatprep.subr.bf16.mxu0 0
    %757 = vmatpush1.bf16.msra.mxu0 %v543
    %758 = vmatprep.subr.bf16.mxu0 0
    %759 = vmatpush1.bf16.msra.mxu0 %v544
    %760 = vmatprep.subr.bf16.mxu0 0
    %761 = vmatpush1.bf16.msra.mxu0 %v545
    %762 = vmatprep.mubr.bf16.mxu0 %v90
    %763 = vmatmul.mubr.bf16.gmra.mrb[0].mxu0 %v89
    %v764 = vpop.f32.mrb[0].mxu0
    %v765 = vadd.f32 %v725, %v764
    %v766 = vpop.f32.mrb[0].mxu0
    %v767 = vpop.f32.mrb[0].mxu0
    %v768 = vpop.f32.mrb[0].mxu0
    %769 = vdwg.mxu0
    %770 = vmax.xlane.f32.xlu0 %v765
    %v771 = vpop.xlane.xlu0 %770
    %v772 = vsub.f32 %v765, %v771
    %v773 = vmul.f32 %v772, 1.442695
    %v774 = vpow.pop %v773
    %v775 = vld [vmem:[#allocation7] sm:$0xff]
    %v776 = vld [vmem:[#allocation7 + $0x8] sm:$0xff]
    %v777 = vld [vmem:[#allocation7 + $0x10] sm:$0xff]
    %v778 = vld [vmem:[#allocation7 + $0x18] sm:$0xff]
    %v779 = vld [vmem:[#allocation7 + $0x20] sm:$0xff]
    %v780 = vld [vmem:[#allocation7 + $0x28] sm:$0xff]
    %v781 = vld [vmem:[#allocation7 + $0x30] sm:$0xff]
    %v782 = vld [vmem:[#allocation7 + $0x38] sm:$0xff]
    %v783 = vld [vmem:[#allocation7 + $0x40] sm:$0xff]
    %v784 = vld [vmem:[#allocation7 + $0x48] sm:$0xff]
    %v785 = vld [vmem:[#allocation7 + $0x50] sm:$0xff]
    %v786 = vld [vmem:[#allocation7 + $0x58] sm:$0xff]
    %v787 = vld [vmem:[#allocation7 + $0x60] sm:$0xff]
    %v788 = vld [vmem:[#allocation7 + $0x68] sm:$0xff]
    %v789 = vld [vmem:[#allocation7 + $0x70] sm:$0xff]
    %v790 = vld [vmem:[#allocation7 + $0x78] sm:$0xff]
    %791 = vmatprep.subr.mxu0 0.0
    %792 = vmatpush1.msra.mxu0 %v775
    %793 = vmatprep.subr.mxu0 0.0
    %794 = vmatpush1.msra.mxu0 %v776
    %795 = vmatprep.subr.mxu0 0.0
    %796 = vmatpush1.msra.mxu0 %v777
    %797 = vmatprep.subr.mxu0 0.0
    %798 = vmatpush1.msra.mxu0 %v778
    %799 = vmatprep.subr.mxu0 0.0
    %800 = vmatpush1.msra.mxu0 %v779
    %801 = vmatprep.subr.mxu0 0.0
    %802 = vmatpush1.msra.mxu0 %v780
    %803 = vmatprep.subr.mxu0 0.0
    %804 = vmatpush1.msra.mxu0 %v781
    %805 = vmatprep.subr.mxu0 0.0
    %806 = vmatpush1.msra.mxu0 %v782
    %807 = vmatprep.subr.mxu0 0.0
    %808 = vmatpush1.msra.mxu0 %v783
    %809 = vmatprep.subr.mxu0 0.0
    %810 = vmatpush1.msra.mxu0 %v784
    %811 = vmatprep.subr.mxu0 0.0
    %812 = vmatpush1.msra.mxu0 %v785
    %813 = vmatprep.subr.mxu0 0.0
    %814 = vmatpush1.msra.mxu0 %v786
    %815 = vmatprep.subr.mxu0 0.0
    %816 = vmatpush1.msra.mxu0 %v787
    %817 = vmatprep.subr.mxu0 0.0
    %818 = vmatpush1.msra.mxu0 %v788
    %819 = vmatprep.subr.mxu0 0.0
    %820 = vmatpush1.msra.mxu0 %v789
    %821 = vmatprep.subr.mxu0 0.0
    %822 = vmatpush1.msra.mxu0 %v790
    %823 = vmatprep.subr.mxu0 0.0
    %824 = vmatpush1.msra.mxu0 0.0
    %825 = vmatprep.subr.mxu0 0.0
    %826 = vmatpush1.msra.mxu0 0.0
    %827 = vmatprep.subr.mxu0 0.0
    %828 = vmatpush1.msra.mxu0 0.0
    %829 = vmatprep.subr.mxu0 0.0
    %830 = vmatpush1.msra.mxu0 0.0
    %831 = vmatprep.subr.mxu0 0.0
    %832 = vmatpush1.msra.mxu0 0.0
    %833 = vmatprep.subr.mxu0 0.0
    %834 = vmatpush1.msra.mxu0 0.0
    %835 = vmatprep.subr.mxu0 0.0
    %836 = vmatpush1.msra.mxu0 0.0
    %837 = vmatprep.subr.mxu0 0.0
    %838 = vmatpush1.msra.mxu0 0.0
    %839 = vmatprep.subr.mxu0 0.0
    %840 = vmatpush1.msra.mxu0 0.0
    %841 = vmatprep.subr.mxu0 0.0
    %842 = vmatpush1.msra.mxu0 0.0
    %843 = vmatprep.subr.mxu0 0.0
    %844 = vmatpush1.msra.mxu0 0.0
    %845 = vmatprep.subr.mxu0 0.0
    %846 = vmatpush1.msra.mxu0 0.0
    %847 = vmatprep.subr.mxu0 0.0
    %848 = vmatpush1.msra.mxu0 0.0
    %849 = vmatprep.subr.mxu0 0.0
    %850 = vmatpush1.msra.mxu0 0.0
    %851 = vmatprep.subr.mxu0 0.0
    %852 = vmatpush1.msra.mxu0 0.0
    %853 = vmatprep.subr.mxu0 0.0
    %854 = vmatpush1.msra.mxu0 0.0
    %855 = vmatprep.mubr.f32.mxu0 0.0
    %856 = vmatmul.mubr.f32.gmra.mrb[0].mxu0 %v774
    %v857 = vpop.f32.mrb[0].mxu0
    %v858 = vadd.f32 0.0, %v857
    %v859 = vpop.f32.mrb[0].mxu0
    %860 = vdwg.mxu0
    %v861 = vmax.f32 %v858, 1e-30
    %v862 = vrcp.pop %v861
    %v863 = vmul.f32 %v774, %v862
    %v864 = vld [vmem:[#allocation8] sm:$0xff]
    %v865 = vld [vmem:[#allocation8 + $0x8] sm:$0xff]
    %v866 = vld [vmem:[#allocation8 + $0x10] sm:$0xff]
    %v867 = vld [vmem:[#allocation8 + $0x18] sm:$0xff]
    %v868 = vld [vmem:[#allocation8 + $0x20] sm:$0xff]
    %v869 = vld [vmem:[#allocation8 + $0x28] sm:$0xff]
    %v870 = vld [vmem:[#allocation8 + $0x30] sm:$0xff]
    %v871 = vld [vmem:[#allocation8 + $0x38] sm:$0xff]
    %v872 = vld [vmem:[#allocation8 + $0x40] sm:$0xff]
    %v873 = vld [vmem:[#allocation8 + $0x48] sm:$0xff]
    %v874 = vld [vmem:[#allocation8 + $0x50] sm:$0xff]
    %v875 = vld [vmem:[#allocation8 + $0x58] sm:$0xff]
    %v876 = vld [vmem:[#allocation8 + $0x60] sm:$0xff]
    %v877 = vld [vmem:[#allocation8 + $0x68] sm:$0xff]
    %v878 = vld [vmem:[#allocation8 + $0x70] sm:$0xff]
    %v879 = vld [vmem:[#allocation8 + $0x78] sm:$0xff]
    %880 = vmatprep.subr.mxu0 0.0
    %881 = vmatpush1.msra.mxu0 %v864
    %882 = vmatprep.subr.mxu0 0.0
    %883 = vmatpush1.msra.mxu0 %v865
    %884 = vmatprep.subr.mxu0 0.0
    %885 = vmatpush1.msra.mxu0 %v866
    %886 = vmatprep.subr.mxu0 0.0
    %887 = vmatpush1.msra.mxu0 %v867
    %888 = vmatprep.subr.mxu0 0.0
    %889 = vmatpush1.msra.mxu0 %v868
    %890 = vmatprep.subr.mxu0 0.0
    %891 = vmatpush1.msra.mxu0 %v869
    %892 = vmatprep.subr.mxu0 0.0
    %893 = vmatpush1.msra.mxu0 %v870
    %894 = vmatprep.subr.mxu0 0.0
    %895 = vmatpush1.msra.mxu0 %v871
    %896 = vmatprep.subr.mxu0 0.0
    %897 = vmatpush1.msra.mxu0 %v872
    %898 = vmatprep.subr.mxu0 0.0
    %899 = vmatpush1.msra.mxu0 %v873
    %900 = vmatprep.subr.mxu0 0.0
    %901 = vmatpush1.msra.mxu0 %v874
    %902 = vmatprep.subr.mxu0 0.0
    %903 = vmatpush1.msra.mxu0 %v875
    %904 = vmatprep.subr.mxu0 0.0
    %905 = vmatpush1.msra.mxu0 %v876
    %906 = vmatprep.subr.mxu0 0.0
    %907 = vmatpush1.msra.mxu0 %v877
    %908 = vmatprep.subr.mxu0 0.0
    %909 = vmatpush1.msra.mxu0 %v878
    %910 = vmatprep.subr.mxu0 0.0
    %911 = vmatpush1.msra.mxu0 %v879
    %912 = vmatprep.subr.mxu0 0.0
    %913 = vmatpush1.msra.mxu0 0.0
    %914 = vmatprep.subr.mxu0 0.0
    %915 = vmatpush1.msra.mxu0 0.0
    %916 = vmatprep.subr.mxu0 0.0
    %917 = vmatpush1.msra.mxu0 0.0
    %918 = vmatprep.subr.mxu0 0.0
    %919 = vmatpush1.msra.mxu0 0.0
    %920 = vmatprep.subr.mxu0 0.0
    %921 = vmatpush1.msra.mxu0 0.0
    %922 = vmatprep.subr.mxu0 0.0
    %923 = vmatpush1.msra.mxu0 0.0
    %924 = vmatprep.subr.mxu0 0.0
    %925 = vmatpush1.msra.mxu0 0.0
    %926 = vmatprep.subr.mxu0 0.0
    %927 = vmatpush1.msra.mxu0 0.0
    %928 = vmatprep.subr.mxu0 0.0
    %929 = vmatpush1.msra.mxu0 0.0
    %930 = vmatprep.subr.mxu0 0.0
    %931 = vmatpush1.msra.mxu0 0.0
    %932 = vmatprep.subr.mxu0 0.0
    %933 = vmatpush1.msra.mxu0 0.0
    %934 = vmatprep.subr.mxu0 0.0
    %935 = vmatpush1.msra.mxu0 0.0
    %936 = vmatprep.subr.mxu0 0.0
    %937 = vmatpush1.msra.mxu0 0.0
    %938 = vmatprep.subr.mxu0 0.0
    %939 = vmatpush1.msra.mxu0 0.0
    %940 = vmatprep.subr.mxu0 0.0
    %941 = vmatpush1.msra.mxu0 0.0
    %942 = vmatprep.subr.mxu0 0.0
    %943 = vmatpush1.msra.mxu0 0.0
    %944 = vmatprep.mubr.f32.mxu0 0.0
    %945 = vmatmul.mubr.f32.gmra.mrb[0].mxu0 %v863
    %v946 = vpop.f32.mrb[0].mxu0
    %v947 = vadd.f32 0.0, %v946
    %v948 = vpop.f32.mrb[0].mxu0
    %949 = vdwg.mxu0
    %v950 = vmax.f32 %v947, 1e-40
    %v951 = vlog2.pop %v950
    %v952 = vmul.f32 %v951, 0.6931472
    %953 = vst [vmem:[#allocation10] sm:$0xff] %v952
    // Predicated region
    $region38: #{tpu_custom_call.1} parent=1 // pred_check
      _
    $region39: #{tpu_custom_call.1} parent=1 // pred_check_branch
      %955 = sbr.rel (0) target = $region41
    $region40: #{tpu_custom_call.1} parent=1 // pred_region
      %s957 = ssub.s32 128, 128
      %958 = vsyncadd [#allocation4], %s957
      %s960 = sshll.u32 [#allocation10], 4
      %s961 = int_to_ptr.vmem [resolvable:$true] %s960
      %963 = dma.vmem_to_hbm [thread:$0]  %s961, 128, %s5, [#allocation4]
    $region41: #{tpu_custom_call.1} parent=1 // pred_fallthru
      _
    // Predicated region
    $region42: #{tpu_custom_call.1} parent=1 // pred_check
      _
    $region43: #{tpu_custom_call.1} parent=1 // pred_check_branch
      %965 = sbr.rel (0) target = $region45
    $region44: #{tpu_custom_call.1} parent=1 // pred_region
      %966 = dma.done [#allocation4], 128
    $region45: #{tpu_custom_call.1} parent=1 // pred_fallthru
      _
    %967 = vsyncpa [#allocation3], 1
    %968 = vsyncpa [#allocation6], 1
    %969 = vsyncpa [#allocation9], 1
    %970 = vsyncpa [#allocation4], 1

</llo_original>
